<compile_context>
chip_gen: v6e
topology: v6e:2x2x1
jax: 0.10.0
libtpu: 0.0.40
codegen_flags: <defaults>
</compile_context>

<pallas_src>
import jax
import jax.numpy as jnp
from jax.experimental import pallas as pl
from jax.experimental.pallas import tpu as pltpu


def _round_up(x, m):
    return (x + m - 1) // m * m


# ------------------------------------------------------------------ kernel --
def upsample_kernel(x_ref, w1_ref, b1_ref, w2_ref, b2_ref, o_ref):
    # x_ref : (Cin, Pt)  one batch element's point tile, native dtype (f32)
    # w1_ref: (D, Cin)   conv1 weight (Interleave + BN1 scale folded), compute dtype
    # b1_ref: (D, 1)     conv1 bias + BN1 shift, f32
    # w2_ref: (ES, D)    conv2 weight (Interleave + BN2 scale folded), compute dtype
    # b2_ref: (ES, 1)    conv2 bias + BN2 shift, f32
    # o_ref : (ES, Pt)   conv2(+BN+ReLU) tile (pre pixel-shuffle), compute dtype
    x = x_ref[...].astype(w1_ref.dtype)            # cast in-kernel: no wrapper HBM pass
    h = jnp.dot(w1_ref[...], x, preferred_element_type=jnp.float32)
    h = jnp.maximum(h + b1_ref[...], 0.0)          # (D, Pt), f32 epilogue
    y = jnp.dot(w2_ref[...], h.astype(w2_ref.dtype),
                preferred_element_type=jnp.float32)
    y = jnp.maximum(y + b2_ref[...], 0.0)          # (ES, Pt), f32 epilogue
    o_ref[...] = y.astype(o_ref.dtype)


def upsample_pallas(x_ncl, w1, b1, w2, b2, p_tile, out_dtype):
    """x_ncl: (N, Cin, P) with P % p_tile == 0.  Returns (N, ES, P) in out_dtype."""
    N, Cin, P = x_ncl.shape
    D = w1.shape[0]
    ES = w2.shape[0]
    assert P % p_tile == 0
    grid = (N, P // p_tile)
    return pl.pallas_call(
        upsample_kernel,
        out_shape=jax.ShapeDtypeStruct((N, ES, P), out_dtype),
        grid=grid,
        in_specs=[
            pl.BlockSpec((pl.Squeezed(), Cin, p_tile), lambda n, j: (n, 0, j)),
            # Weights / biases: constant index_map -> resident in VMEM for the
            # whole grid (a few KiB total).
            pl.BlockSpec((D, Cin), lambda n, j: (0, 0)),
            pl.BlockSpec((D, 1), lambda n, j: (0, 0)),
            pl.BlockSpec((ES, D), lambda n, j: (0, 0)),
            pl.BlockSpec((ES, 1), lambda n, j: (0, 0)),
        ],
        out_specs=pl.BlockSpec((pl.Squeezed(), ES, p_tile), lambda n, j: (n, 0, j)),
        compiler_params=pltpu.CompilerParams(
            dimension_semantics=("parallel", "parallel")),
    )(x_ncl, w1, b1, w2, b2)


# ----------------------------------------------------------------- tiling ---
def _plan_point_tiling(P, N, per_point_bytes, vmem_budget_bytes=10 << 20,
                       pt_ceiling=8192):
    """Pick (p_tile, P_padded): biggest lane-aligned tile within a VMEM budget."""
    budget_pt = min(pt_ceiling, max(128, vmem_budget_bytes // per_point_bytes))
    budget_pt = max(128, budget_pt // 128 * 128)
    if P <= budget_pt:
        pt, p_pad = P, P                  # whole axis in one (VMEM-safe) tile
    else:
        pt = budget_pt
        p_pad = _round_up(P, pt)          # zero-pad ragged tail host-side
    # v7x has 2 TensorCores sharing the "parallel" grid axes: make sure the grid
    # has >= 2 steps whenever the tile can be halved while staying 128-aligned.
    while N * (p_pad // pt) < 2 and pt % 256 == 0:
        pt //= 2
    return pt, p_pad


# ------------------------------------------------------------------- glue ---
def interleave_perm(C, groups):
    # PyTorch Interleave(groups): (N, g, C//g, L) -> transpose(1,2) -> (N, C, L).
    # Output channel j picks input channel perm[j] (identity for groups=1).
    return jnp.arange(C).reshape(groups, C // groups).T.reshape(-1)


def fold_bn(conv_b, gamma, beta, mean, var, eps=1e-5):
    scale = gamma / jnp.sqrt(var + eps)
    shift = beta + (conv_b - mean) * scale
    return scale, shift


def upsample_block_forward(x, params, E_i, S_i, groups=(1, 1),
                           compute_dtype=jnp.bfloat16,
                           vmem_budget_bytes=10 << 20, pt_ceiling=8192):
    """x: (N, C_in, P) in PyTorch NCL layout.  Returns (N, E_i, P*S_i), compute_dtype.

    Eval-mode BatchNorm (running stats) is assumed; Interleave + BN are folded
    into the conv weights host-side so the kernel epilogue is bias + ReLU.
    """
    # TODO(synk): grouped (groups>1) 1x1 conv would need block-diagonal weights;
    # only the default groups=(1,1) is implemented densely here.
    assert groups == (1, 1)
    (w1, b1, g1, be1, m1, v1, w2, b2, g2, be2, m2, v2) = params
    N, Cin, P = x.shape
    D = w1.shape[0]
    ES = w2.shape[0]
    assert ES == E_i * S_i

    perm1 = interleave_perm(D, groups[0])
    perm2 = interleave_perm(ES, groups[1])
    w1p, b1p = w1[perm1], b1[perm1]
    w2p, b2p = w2[perm2], b2[perm2]
    s1, sh1 = fold_bn(b1p, g1, be1, m1, v1)
    s2, sh2 = fold_bn(b2p, g2, be2, m2, v2)
    w1f = (w1p * s1[:, None]).astype(compute_dtype)        # (D, Cin)
    w2f = (w2p * s2[:, None]).astype(compute_dtype)        # (ES, D)
    sh1 = sh1[:, None].astype(jnp.float32)                 # (D, 1)
    sh2 = sh2[:, None].astype(jnp.float32)                 # (ES, 1)

    # For tiny point counts, fold the batch axis into the point/lane axis so the
    # kernel's stores are lane-dense (vst.msk below 128 lanes).  The two small
    # XLA transposes this needs are negligible at these sizes.
    fold_batch = (P < 128) and (N > 1)
    if fold_batch:
        x_k = jnp.transpose(x, (1, 0, 2)).reshape(1, Cin, N * P)
        Nk, Pk = 1, N * P
    else:
        x_k, Nk, Pk = x, N, P

    # Rough per-point VMEM bytes: double-buffered x/out blocks + f32 / compute-
    # dtype intermediates.  Keeps the working set inside default scoped VMEM on
    # all generations, so no explicit vmem_limit_bytes is needed.
    in_item = jnp.dtype(x.dtype).itemsize
    out_item = jnp.dtype(compute_dtype).itemsize
    per_point = (2 * (Cin * in_item + ES * out_item)
                 + 4 * (D + ES)
                 + out_item * (Cin + D))
    pt, p_pad = _plan_point_tiling(Pk, Nk, per_point,
                                   vmem_budget_bytes, pt_ceiling)
    if p_pad != Pk:
        x_k = jnp.pad(x_k, ((0, 0), (0, 0), (0, p_pad - Pk)))

    y = upsample_pallas(x_k, w1f, sh1, w2f, sh2, pt, compute_dtype)  # (Nk,ES,p_pad)

    if p_pad != Pk:
        y = y[..., :Pk]
    if fold_batch:
        y = y.reshape(ES, N, P).transpose(1, 0, 2)                   # (N, ES, P)

    # PyTorch tail: (N,E*S,P) -> (N,E,S,P) -> transpose(-2,-1) -> (N,E,P*S).
    # Left as a single XLA transpose over the half-width (compute-dtype) output.
    # TODO(synk): fuse this pixel shuffle into the kernel epilogue once the
    # required sublane->lane interleave relayout is confirmed to lower in Mosaic.
    return y.reshape(N, E_i, S_i, P).swapaxes(-2, -1).reshape(N, E_i, P * S_i)


# -------------------------------------------------------------- reference ---
def reference_forward(x, params, E_i, S_i, eps=1e-5):
    (w1, b1, g1, be1, m1, v1, w2, b2, g2, be2, m2, v2) = params
    N, Cin, P = x.shape
    h = jnp.einsum('oc,ncl->nol', w1, x) + b1[None, :, None]
    h = (h - m1[None, :, None]) / jnp.sqrt(v1 + eps)[None, :, None]
    h = h * g1[None, :, None] + be1[None, :, None]
    h = jnp.maximum(h, 0.0)
    y = jnp.einsum('oc,ncl->nol', w2, h) + b2[None, :, None]
    y = (y - m2[None, :, None]) / jnp.sqrt(v2 + eps)[None, :, None]
    y = y * g2[None, :, None] + be2[None, :, None]
    y = jnp.maximum(y, 0.0)                                # (N, E*S, P)
    return y.reshape(N, E_i, S_i, P).transpose(0, 1, 3, 2).reshape(N, E_i, P * S_i)


# ------------------------------------------------------------------- main ---
if __name__ == "__main__":
    # Module hyper-params (small, consistent with the __init__ signature).
    D = [32, 64]
    E = [8, 16]
    M = [1, 1]
    P = [16, 8]
    S = [4, 2]
    i = 0
    extra_in_ch = 3
    groups = (1, 1)

    N = 2
    Cin = E[i + 1] + (D[i] + extra_in_ch) * bool(M[i])     # 16 + 35 = 51
    Dmid = D[i]                                            # 32
    ES = E[i] * S[i]                                       # 32
    L = P[i]                                               # 16

    key = jax.random.PRNGKey(0)
    ks = jax.random.split(key, 14)
    w1 = jax.random.normal(ks[0], (Dmid, Cin), jnp.float32) * 0.1
    b1 = jax.random.normal(ks[1], (Dmid,), jnp.float32) * 0.1
    g1 = 1.0 + 0.1 * jax.random.normal(ks[2], (Dmid,), jnp.float32)
    be1 = 0.1 * jax.random.normal(ks[3], (Dmid,), jnp.float32)
    m1 = 0.1 * jax.random.normal(ks[4], (Dmid,), jnp.float32)
    v1 = jnp.abs(jax.random.normal(ks[5], (Dmid,), jnp.float32)) + 0.5

    w2 = jax.random.normal(ks[6], (ES, Dmid), jnp.float32) * 0.1
    b2 = jax.random.normal(ks[7], (ES,), jnp.float32) * 0.1
    g2 = 1.0 + 0.1 * jax.random.normal(ks[8], (ES,), jnp.float32)
    be2 = 0.1 * jax.random.normal(ks[9], (ES,), jnp.float32)
    m2 = 0.1 * jax.random.normal(ks[10], (ES,), jnp.float32)
    v2 = jnp.abs(jax.random.normal(ks[11], (ES,), jnp.float32)) + 0.5

    params = (w1, b1, g1, be1, m1, v1, w2, b2, g2, be2, m2, v2)

    # --- case A: module-consistent shapes (P=16 -> batch folded into lanes) ---
    x = jax.random.normal(ks[12], (N, Cin, L), jnp.float32)
    ref = reference_forward(x, params, E[i], S[i])

    out_f32 = jax.block_until_ready(
        upsample_block_forward(x, params, E[i], S[i], groups,
                               compute_dtype=jnp.float32))
    assert out_f32.shape == (N, E[i], L * S[i]), out_f32.shape
    assert jnp.allclose(out_f32, ref, atol=1e-4, rtol=1e-4), \
        float(jnp.max(jnp.abs(out_f32 - ref)))

    out_bf16 = jax.block_until_ready(
        upsample_block_forward(x, params, E[i], S[i], groups,
                               compute_dtype=jnp.bfloat16))
    assert out_bf16.shape == (N, E[i], L * S[i]), out_bf16.shape
    assert jnp.allclose(out_bf16.astype(jnp.float32), ref, atol=5e-2, rtol=5e-2), \
        float(jnp.max(jnp.abs(out_bf16.astype(jnp.float32) - ref)))

    # --- case B: ragged P with a forced small tile ceiling, exercising the
    #     tiled production path (grid (2,2), 128-lane blocks, host-side pad +
    #     output slice-back). ---
    L2 = 200
    x2 = jax.random.normal(ks[13], (N, Cin, L2), jnp.float32)
    ref2 = reference_forward(x2, params, E[i], S[i])

    out2_f32 = jax.block_until_ready(
        upsample_block_forward(x2, params, E[i], S[i], groups,
                               compute_dtype=jnp.float32, pt_ceiling=128))
    assert out2_f32.shape == (N, E[i], L2 * S[i]), out2_f32.shape
    assert jnp.allclose(out2_f32, ref2, atol=1e-4, rtol=1e-4), \
        float(jnp.max(jnp.abs(out2_f32 - ref2)))

    out2_bf16 = jax.block_until_ready(
        upsample_block_forward(x2, params, E[i], S[i], groups,
                               compute_dtype=jnp.bfloat16, pt_ceiling=128))
    assert out2_bf16.shape == (N, E[i], L2 * S[i]), out2_bf16.shape
    assert jnp.allclose(out2_bf16.astype(jnp.float32), ref2, atol=5e-2, rtol=5e-2), \
        float(jnp.max(jnp.abs(out2_bf16.astype(jnp.float32) - ref2)))

    print("KERNEL_OK")
</pallas_src>

<mosaic_0001>
module attributes {stable_mosaic.version = 11 : i64} {
  func.func @upsample_kernel(%arg0: i32, %arg1: i32, %arg2: memref<1x51x32xf32, #tpu.memory_space<vmem>>, %arg3: memref<32x51xf32, #tpu.memory_space<vmem>>, %arg4: memref<32x1xf32, #tpu.memory_space<vmem>>, %arg5: memref<32x32xf32, #tpu.memory_space<vmem>>, %arg6: memref<32x1xf32, #tpu.memory_space<vmem>>, %arg7: memref<1x32x32xf32, #tpu.memory_space<vmem>>) attributes {dimension_semantics = [#tpu.dimension_semantics<parallel>, #tpu.dimension_semantics<parallel>], iteration_bounds = array<i64: 1, 1>, scalar_prefetch = 0 : i64, scratch_operands = 0 : i64, tpu.core_type = #tpu.core_type<tc>, window_params = [{transform_indices = @transform_0, window_bounds = array<i64: 1, 51, 32>}, {pipeline_mode = #tpu.pipeline_mode<synchronous>, transform_indices = @transform_1, window_bounds = array<i64: 32, 51>}, {pipeline_mode = #tpu.pipeline_mode<synchronous>, transform_indices = @transform_2, window_bounds = array<i64: 32, 1>}, {pipeline_mode = #tpu.pipeline_mode<synchronous>, transform_indices = @transform_3, window_bounds = array<i64: 32, 32>}, {pipeline_mode = #tpu.pipeline_mode<synchronous>, transform_indices = @transform_4, window_bounds = array<i64: 32, 1>}, {transform_indices = @transform_5, window_bounds = array<i64: 1, 32, 32>}]} {
    %c0 = arith.constant 0 : index
    %c0_0 = arith.constant 0 : index
    %c0_1 = arith.constant 0 : index
    %0 = vector.load %arg2[%c0, %c0_0, %c0_1] : memref<1x51x32xf32, #tpu.memory_space<vmem>>, vector<1x51x32xf32>
    %1 = vector.shape_cast %0 : vector<1x51x32xf32> to vector<51x32xf32>
    %c0_2 = arith.constant 0 : index
    %c0_3 = arith.constant 0 : index
    %2 = vector.load %arg3[%c0_2, %c0_3] : memref<32x51xf32, #tpu.memory_space<vmem>>, vector<32x51xf32>
    %cst = arith.constant dense<0.000000e+00> : vector<32x32xf32>
    %3 = tpu.matmul %2, %1, %cst {dimension_numbers = #tpu.dot_dimension_numbers<[1], [0], [0], [1], [0, 0, 1, 1], [], []>} : vector<32x51xf32>, vector<51x32xf32>, vector<32x32xf32> -> vector<32x32xf32>
    %c0_4 = arith.constant 0 : index
    %c0_5 = arith.constant 0 : index
    %4 = vector.load %arg4[%c0_4, %c0_5] : memref<32x1xf32, #tpu.memory_space<vmem>>, vector<32x1xf32>
    %5 = vector.broadcast %4 : vector<32x1xf32> to vector<32x32xf32>
    %6 = arith.addf %3, %5 : vector<32x32xf32>
    %cst_6 = arith.constant 0.000000e+00 : f32
    %7 = vector.broadcast %cst_6 : f32 to vector<32x32xf32>
    %8 = arith.maximumf %6, %7 : vector<32x32xf32>
    %c0_7 = arith.constant 0 : index
    %c0_8 = arith.constant 0 : index
    %9 = vector.load %arg5[%c0_7, %c0_8] : memref<32x32xf32, #tpu.memory_space<vmem>>, vector<32x32xf32>
    %cst_9 = arith.constant dense<0.000000e+00> : vector<32x32xf32>
    %10 = tpu.matmul %9, %8, %cst_9 {dimension_numbers = #tpu.dot_dimension_numbers<[1], [0], [0], [1], [0, 0, 1, 1], [], []>} : vector<32x32xf32>, vector<32x32xf32>, vector<32x32xf32> -> vector<32x32xf32>
    %c0_10 = arith.constant 0 : index
    %c0_11 = arith.constant 0 : index
    %11 = vector.load %arg6[%c0_10, %c0_11] : memref<32x1xf32, #tpu.memory_space<vmem>>, vector<32x1xf32>
    %12 = vector.broadcast %11 : vector<32x1xf32> to vector<32x32xf32>
    %13 = arith.addf %10, %12 : vector<32x32xf32>
    %cst_12 = arith.constant 0.000000e+00 : f32
    %14 = vector.broadcast %cst_12 : f32 to vector<32x32xf32>
    %15 = arith.maximumf %13, %14 : vector<32x32xf32>
    %c0_13 = arith.constant 0 : index
    %c0_14 = arith.constant 0 : index
    %c0_15 = arith.constant 0 : index
    %16 = vector.load %arg7[%c0_13, %c0_14, %c0_15] : memref<1x32x32xf32, #tpu.memory_space<vmem>>, vector<1x32x32xf32>
    %17 = vector.shape_cast %16 : vector<1x32x32xf32> to vector<32x32xf32>
    %18 = vector.shape_cast %15 : vector<32x32xf32> to vector<1x32x32xf32>
    tpu.vector_store %arg7[%c0_13, %c0_14, %c0_15], %18 {strides = array<i32>} : memref<1x32x32xf32, #tpu.memory_space<vmem>>, vector<1x32x32xf32>,
    return
  }
  func.func @transform_0(%arg0: i32, %arg1: i32) -> (i32, i32, i32) {
    %c0_i32 = arith.constant 0 : i32
    %c0_i32_0 = arith.constant 0 : i32
    return %arg0, %c0_i32, %arg1 : i32, i32, i32
  }
  func.func @transform_1(%arg0: i32, %arg1: i32) -> (i32, i32) {
    %c0_i32 = arith.constant 0 : i32
    %c0_i32_0 = arith.constant 0 : i32
    %c0_i32_1 = arith.constant 0 : i32
    return %c0_i32, %c0_i32_0 : i32, i32
  }
  func.func @transform_2(%arg0: i32, %arg1: i32) -> (i32, i32) {
    %c0_i32 = arith.constant 0 : i32
    %c0_i32_0 = arith.constant 0 : i32
    %c0_i32_1 = arith.constant 0 : i32
    return %c0_i32, %c0_i32_0 : i32, i32
  }
  func.func @transform_3(%arg0: i32, %arg1: i32) -> (i32, i32) {
    %c0_i32 = arith.constant 0 : i32
    %c0_i32_0 = arith.constant 0 : i32
    %c0_i32_1 = arith.constant 0 : i32
    return %c0_i32, %c0_i32_0 : i32, i32
  }
  func.func @transform_4(%arg0: i32, %arg1: i32) -> (i32, i32) {
    %c0_i32 = arith.constant 0 : i32
    %c0_i32_0 = arith.constant 0 : i32
    %c0_i32_1 = arith.constant 0 : i32
    return %c0_i32, %c0_i32_0 : i32, i32
  }
  func.func @transform_5(%arg0: i32, %arg1: i32) -> (i32, i32, i32) {
    %c0_i32 = arith.constant 0 : i32
    %c0_i32_0 = arith.constant 0 : i32
    return %arg0, %c0_i32, %arg1 : i32, i32, i32
  }
}

</mosaic_0001>

<llo_original>
// kernel: tpu_custom_call.1
$region0: #{tpu_custom_call.1}
  #allocation0 [shape = 'u32[]', space=smem, size = 0x4, offset = 0x4, fixed_abs, tag = 'smem constant byte address 0x4 - core index']
  #allocation1 [shape = 'u32[144,128]{1,0:T(1,128)}', space=vmem, size = 0x12000, scoped, tag = 'internal scratch']
  %s0 = inlined_call_operand.vmem [shape: f32[1,51,32], index: 0, kind: input, shape index: {}]
  %s1 = inlined_call_operand.vmem [shape: f32[32,51], index: 1, kind: input, shape index: {}]
  %s2 = inlined_call_operand.vmem [shape: f32[32,1], index: 2, kind: input, shape index: {}]
  %s3 = inlined_call_operand.vmem [shape: f32[32,32], index: 3, kind: input, shape index: {}]
  %s4 = inlined_call_operand.vmem [shape: f32[32,1], index: 4, kind: input, shape index: {}]
  %s5 = inlined_call_operand.hbm [shape: f32[1,32,32], index: 5, kind: output, shape index: {}]
  %s6 = sld [smem:[#allocation0]]
  $region30: #{tpu_custom_call.1} parent=0
    _
  %s8 = ssub.s32 1, %s6
  %s9 = scalar_select 0, %s8, %s6
  $region1: #{tpu_custom_call.1} parent=0
    #allocation2 [shape = 'u8[16384]{0}', space=vmem, size = 0x4000, scoped, tag = 'output window, operand 0, single buffered']
    #allocation3 [shape = 's32[1]{0}', space=sflag, size = 0x4, scoped, tag = 'scoped memory for tpu_custom_call.1']
    %10 = vsyncpa [#allocation3], 0
    // Predicated region
    $region2: #{tpu_custom_call.1} parent=1 // pred_check
      _
    $region3: #{tpu_custom_call.1} parent=1 // pred_check_branch
      %12 = sbr.rel (0) target = $region5
    $region4: #{tpu_custom_call.1} parent=1 // pred_region
      _
    $region5: #{tpu_custom_call.1} parent=1 // pred_fallthru
      _
    // Predicated region
    $region6: #{tpu_custom_call.1} parent=1 // pred_check
      _
    $region7: #{tpu_custom_call.1} parent=1 // pred_check_branch
      %14 = sbr.rel (0) target = $region9
    $region8: #{tpu_custom_call.1} parent=1 // pred_region
      _
    $region9: #{tpu_custom_call.1} parent=1 // pred_fallthru
      _
    // Predicated region
    $region10: #{tpu_custom_call.1} parent=1 // pred_check
      _
    $region11: #{tpu_custom_call.1} parent=1 // pred_check_branch
      %16 = sbr.rel (0) target = $region13
    $region12: #{tpu_custom_call.1} parent=1 // pred_region
      _
    $region13: #{tpu_custom_call.1} parent=1 // pred_fallthru
      _
    // Predicated region
    $region14: #{tpu_custom_call.1} parent=1 // pred_check
      _
    $region15: #{tpu_custom_call.1} parent=1 // pred_check_branch
      %18 = sbr.rel (0) target = $region17
    $region16: #{tpu_custom_call.1} parent=1 // pred_region
      _
    $region17: #{tpu_custom_call.1} parent=1 // pred_fallthru
      _
    // Predicated region
    $region18: #{tpu_custom_call.1} parent=1 // pred_check
      _
    $region19: #{tpu_custom_call.1} parent=1 // pred_check_branch
      %20 = sbr.rel (0) target = $region21
    $region20: #{tpu_custom_call.1} parent=1 // pred_region
      _
    $region21: #{tpu_custom_call.1} parent=1 // pred_fallthru
      _
    %v21 = vld [vmem:[%s0] sm:$0xff]
    %v22 = vld [vmem:[%s0 + $0x8] sm:$0xff]
    %v23 = vld [vmem:[%s0 + $0x10] sm:$0xff]
    %v24 = vld [vmem:[%s0 + $0x18] sm:$0xff]
    %v25 = vld [vmem:[%s0 + $0x20] sm:$0xff]
    %v26 = vld [vmem:[%s0 + $0x28] sm:$0xff]
    %v27 = vld [vmem:[%s0 + $0x30] sm:$0x7]
    %v28 = vld [vmem:[%s1] sm:$0xff]
    %v29 = vld [vmem:[%s1 + $0x8] sm:$0xff]
    %v30 = vld [vmem:[%s1 + $0x10] sm:$0xff]
    %v31 = vld [vmem:[%s1 + $0x18] sm:$0xff]
    %v32 = vld [vmem:[%s2] sm:$0xff]
    %v33 = vld [vmem:[%s2 + $0x8] sm:$0xff]
    %v34 = vld [vmem:[%s2 + $0x10] sm:$0xff]
    %v35 = vld [vmem:[%s2 + $0x18] sm:$0xff]
    %37 = vset.pattern.permute.xlu0 0
    %38 = vperm.xlu0 %37, %v32
    %v39 = vpop.permute.xlu0 %38
    %42 = vset.pattern.permute.xlu0 0
    %43 = vperm.xlu0 %42, %v33
    %v44 = vpop.permute.xlu0 %43
    %47 = vset.pattern.permute.xlu0 0
    %48 = vperm.xlu0 %47, %v34
    %v49 = vpop.permute.xlu0 %48
    %52 = vset.pattern.permute.xlu0 0
    %53 = vperm.xlu0 %52, %v35
    %v54 = vpop.permute.xlu0 %53
    %vm56 = vcmask 416768
    %v58 = vsel %vm56, %v28, 0
    %v61 = vsel %vm56, %v29, 0
    %v64 = vsel %vm56, %v30, 0
    %v67 = vsel %vm56, %v31, 0
    %vm69 = vcmask 1042432
    %v71 = vsel %vm69, %v27, 0
    %73 = vmatprep.subr.mxu0 0.0
    %74 = vmatpush1.msra.mxu0 0.0
    %75 = vmatprep.subr.mxu0 0.0
    %76 = vmatpush1.msra.mxu0 0.0
    %77 = vmatprep.subr.mxu0 0.0
    %78 = vmatpush1.msra.mxu0 0.0
    %79 = vmatprep.subr.mxu0 0.0
    %80 = vmatpush1.msra.mxu0 0.0
    %81 = vmatprep.subr.mxu0 0.0
    %82 = vmatpush1.msra.mxu0 0.0
    %83 = vmatprep.subr.mxu0 0.0
    %84 = vmatpush1.msra.mxu0 0.0
    %85 = vmatprep.subr.mxu0 0.0
    %86 = vmatpush1.msra.mxu0 0.0
    %87 = vmatprep.subr.mxu0 0.0
    %88 = vmatpush1.msra.mxu0 0.0
    %89 = vmatprep.subr.mxu0 0.0
    %90 = vmatpush1.msra.mxu0 0.0
    %91 = vmatprep.subr.mxu0 0.0
    %92 = vmatpush1.msra.mxu0 %v71
    %93 = vmatprep.subr.mxu0 0.0
    %94 = vmatpush1.msra.mxu0 %v26
    %95 = vmatprep.subr.mxu0 0.0
    %96 = vmatpush1.msra.mxu0 %v25
    %97 = vmatprep.subr.mxu0 0.0
    %98 = vmatpush1.msra.mxu0 %v24
    %99 = vmatprep.subr.mxu0 0.0
    %100 = vmatpush1.msra.mxu0 %v23
    %101 = vmatprep.subr.mxu0 0.0
    %102 = vmatpush1.msra.mxu0 %v22
    %103 = vmatprep.subr.mxu0 0.0
    %104 = vmatpush1.msra.mxu0 %v21
    %105 = vmatprep.subr.mxu0 0.0
    %106 = vmatpush2.msra.mxu0 0.0
    %107 = vmatprep.subr.mxu0 0.0
    %108 = vmatpush2.msra.mxu0 0.0
    %109 = vmatprep.subr.mxu0 0.0
    %110 = vmatpush2.msra.mxu0 0.0
    %111 = vmatprep.subr.mxu0 0.0
    %112 = vmatpush2.msra.mxu0 0.0
    %113 = vmatprep.subr.mxu0 0.0
    %114 = vmatpush2.msra.mxu0 0.0
    %115 = vmatprep.subr.mxu0 0.0
    %116 = vmatpush2.msra.mxu0 0.0
    %117 = vmatprep.subr.mxu0 0.0
    %118 = vmatpush2.msra.mxu0 0.0
    %119 = vmatprep.subr.mxu0 0.0
    %120 = vmatpush2.msra.mxu0 0.0
    %121 = vmatprep.subr.mxu0 0.0
    %122 = vmatpush2.msra.mxu0 0.0
    %123 = vmatprep.subr.mxu0 0.0
    %124 = vmatpush2.msra.mxu0 0.0
    %125 = vmatprep.subr.mxu0 0.0
    %126 = vmatpush2.msra.mxu0 0.0
    %127 = vmatprep.subr.mxu0 0.0
    %128 = vmatpush2.msra.mxu0 0.0
    %129 = vmatprep.subr.mxu0 0.0
    %130 = vmatpush2.msra.mxu0 0.0
    %131 = vmatprep.subr.mxu0 0.0
    %132 = vmatpush2.msra.mxu0 0.0
    %133 = vmatprep.subr.mxu0 0.0
    %134 = vmatpush2.msra.mxu0 0.0
    %135 = vmatprep.subr.mxu0 0.0
    %136 = vmatpush2.msra.mxu0 0.0
    %137 = vmatprep.mubr.f32.mxu0 0.0
    %138 = vmatmul.mubr.f32.gmra.mxu0 %v58
    %v139 = vpop.f32.mrf.mxu0
    %v140 = vadd.f32 %v39, %v139
    %v141 = vpop.f32.mrf.mxu0
    %142 = vmatprep.mubr.f32.mxu0 0.0
    %143 = vmatmul.mubr.f32.gmra.mxu0 %v61
    %v144 = vpop.f32.mrf.mxu0
    %v145 = vadd.f32 %v44, %v144
    %v146 = vpop.f32.mrf.mxu0
    %147 = vmatprep.mubr.f32.mxu0 0.0
    %148 = vmatmul.mubr.f32.gmra.mxu0 %v64
    %v149 = vpop.f32.mrf.mxu0
    %v150 = vadd.f32 %v49, %v149
    %v151 = vpop.f32.mrf.mxu0
    %152 = vmatprep.mubr.f32.mxu0 0.0
    %153 = vmatmul.mubr.f32.gmra.mxu0 %v67
    %v154 = vpop.f32.mrf.mxu0
    %v155 = vadd.f32 %v54, %v154
    %v156 = vpop.f32.mrf.mxu0
    %157 = vdwg.mxu0
    %v158 = vmax.f32 %v140, 0.0
    %v159 = vmax.f32 %v145, 0.0
    %v160 = vmax.f32 %v150, 0.0
    %v161 = vmax.f32 %v155, 0.0
    %v162 = vld [vmem:[%s3] sm:$0xff]
    %v163 = vld [vmem:[%s3 + $0x8] sm:$0xff]
    %v164 = vld [vmem:[%s3 + $0x10] sm:$0xff]
    %v165 = vld [vmem:[%s3 + $0x18] sm:$0xff]
    %v166 = vld [vmem:[%s4] sm:$0xff]
    %v167 = vld [vmem:[%s4 + $0x8] sm:$0xff]
    %v168 = vld [vmem:[%s4 + $0x10] sm:$0xff]
    %v169 = vld [vmem:[%s4 + $0x18] sm:$0xff]
    %171 = vset.pattern.permute.xlu0 0
    %172 = vperm.xlu0 %171, %v166
    %v173 = vpop.permute.xlu0 %172
    %176 = vset.pattern.permute.xlu0 0
    %177 = vperm.xlu0 %176, %v167
    %v178 = vpop.permute.xlu0 %177
    %181 = vset.pattern.permute.xlu0 0
    %182 = vperm.xlu0 %181, %v168
    %v183 = vpop.permute.xlu0 %182
    %186 = vset.pattern.permute.xlu0 0
    %187 = vperm.xlu0 %186, %v169
    %v188 = vpop.permute.xlu0 %187
    %vm190 = vcmask 261120
    %v192 = vsel %vm190, %v162, 0
    %v195 = vsel %vm190, %v163, 0
    %v198 = vsel %vm190, %v164, 0
    %v201 = vsel %vm190, %v165, 0
    %203 = vmatprep.subr.mxu0 0.0
    %204 = vmatpush1.msra.mxu0 0.0
    %205 = vmatprep.subr.mxu0 0.0
    %206 = vmatpush1.msra.mxu0 0.0
    %207 = vmatprep.subr.mxu0 0.0
    %208 = vmatpush1.msra.mxu0 0.0
    %209 = vmatprep.subr.mxu0 0.0
    %210 = vmatpush1.msra.mxu0 0.0
    %211 = vmatprep.subr.mxu0 0.0
    %212 = vmatpush1.msra.mxu0 0.0
    %213 = vmatprep.subr.mxu0 0.0
    %214 = vmatpush1.msra.mxu0 0.0
    %215 = vmatprep.subr.mxu0 0.0
    %216 = vmatpush1.msra.mxu0 0.0
    %217 = vmatprep.subr.mxu0 0.0
    %218 = vmatpush1.msra.mxu0 0.0
    %219 = vmatprep.subr.mxu0 0.0
    %220 = vmatpush1.msra.mxu0 0.0
    %221 = vmatprep.subr.mxu0 0.0
    %222 = vmatpush1.msra.mxu0 0.0
    %223 = vmatprep.subr.mxu0 0.0
    %224 = vmatpush1.msra.mxu0 0.0
    %225 = vmatprep.subr.mxu0 0.0
    %226 = vmatpush1.msra.mxu0 0.0
    %227 = vmatprep.subr.mxu0 0.0
    %228 = vmatpush1.msra.mxu0 %v161
    %229 = vmatprep.subr.mxu0 0.0
    %230 = vmatpush1.msra.mxu0 %v160
    %231 = vmatprep.subr.mxu0 0.0
    %232 = vmatpush1.msra.mxu0 %v159
    %233 = vmatprep.subr.mxu0 0.0
    %234 = vmatpush1.msra.mxu0 %v158
    %235 = vmatprep.subr.mxu0 0.0
    %236 = vmatpush2.msra.mxu0 0.0
    %237 = vmatprep.subr.mxu0 0.0
    %238 = vmatpush2.msra.mxu0 0.0
    %239 = vmatprep.subr.mxu0 0.0
    %240 = vmatpush2.msra.mxu0 0.0
    %241 = vmatprep.subr.mxu0 0.0
    %242 = vmatpush2.msra.mxu0 0.0
    %243 = vmatprep.subr.mxu0 0.0
    %244 = vmatpush2.msra.mxu0 0.0
    %245 = vmatprep.subr.mxu0 0.0
    %246 = vmatpush2.msra.mxu0 0.0
    %247 = vmatprep.subr.mxu0 0.0
    %248 = vmatpush2.msra.mxu0 0.0
    %249 = vmatprep.subr.mxu0 0.0
    %250 = vmatpush2.msra.mxu0 0.0
    %251 = vmatprep.subr.mxu0 0.0
    %252 = vmatpush2.msra.mxu0 0.0
    %253 = vmatprep.subr.mxu0 0.0
    %254 = vmatpush2.msra.mxu0 0.0
    %255 = vmatprep.subr.mxu0 0.0
    %256 = vmatpush2.msra.mxu0 0.0
    %257 = vmatprep.subr.mxu0 0.0
    %258 = vmatpush2.msra.mxu0 0.0
    %259 = vmatprep.subr.mxu0 0.0
    %260 = vmatpush2.msra.mxu0 0.0
    %261 = vmatprep.subr.mxu0 0.0
    %262 = vmatpush2.msra.mxu0 0.0
    %263 = vmatprep.subr.mxu0 0.0
    %264 = vmatpush2.msra.mxu0 0.0
    %265 = vmatprep.subr.mxu0 0.0
    %266 = vmatpush2.msra.mxu0 0.0
    %267 = vmatprep.mubr.f32.mxu0 0.0
    %268 = vmatmul.mubr.f32.gmra.mxu0 %v192
    %v269 = vpop.f32.mrf.mxu0
    %v270 = vadd.f32 %v173, %v269
    %v271 = vpop.f32.mrf.mxu0
    %272 = vmatprep.mubr.f32.mxu0 0.0
    %273 = vmatmul.mubr.f32.gmra.mxu0 %v195
    %v274 = vpop.f32.mrf.mxu0
    %v275 = vadd.f32 %v178, %v274
    %v276 = vpop.f32.mrf.mxu0
    %277 = vmatprep.mubr.f32.mxu0 0.0
    %278 = vmatmul.mubr.f32.gmra.mxu0 %v198
    %v279 = vpop.f32.mrf.mxu0
    %v280 = vadd.f32 %v183, %v279
    %v281 = vpop.f32.mrf.mxu0
    %282 = vmatprep.mubr.f32.mxu0 0.0
    %283 = vmatmul.mubr.f32.gmra.mxu0 %v201
    %v284 = vpop.f32.mrf.mxu0
    %v285 = vadd.f32 %v188, %v284
    %v286 = vpop.f32.mrf.mxu0
    %287 = vdwg.mxu0
    %v288 = vmax.f32 %v270, 0.0
    %v289 = vmax.f32 %v275, 0.0
    %v290 = vmax.f32 %v280, 0.0
    %v291 = vmax.f32 %v285, 0.0
    %292 = vst.msk [vmem:[#allocation2] sm:$0xff] %vm190, %v288
    %293 = vst.msk [vmem:[#allocation2 + $0x8] sm:$0xff] %vm190, %v289
    %294 = vst.msk [vmem:[#allocation2 + $0x10] sm:$0xff] %vm190, %v290
    %295 = vst.msk [vmem:[#allocation2 + $0x18] sm:$0xff] %vm190, %v291
    // Predicated region
    $region22: #{tpu_custom_call.1} parent=1 // pred_check
      _
    $region23: #{tpu_custom_call.1} parent=1 // pred_check_branch
      %297 = sbr.rel (0) target = $region25
    $region24: #{tpu_custom_call.1} parent=1 // pred_region
      %s299 = ssub.s32 512, 512
      %300 = vsyncadd [#allocation3], %s299
      %s301 = sshll.u32 [#allocation2], 4
      %s302 = int_to_ptr.vmem [resolvable:$true] %s301
      %307 = dma.vmem_to_hbm [thread:$0]  %s302, 512, %s5, [#allocation3], 128, 128, 8
    $region25: #{tpu_custom_call.1} parent=1 // pred_fallthru
      _
    // Predicated region
    $region26: #{tpu_custom_call.1} parent=1 // pred_check
      _
    $region27: #{tpu_custom_call.1} parent=1 // pred_check_branch
      %309 = sbr.rel (0) target = $region29
    $region28: #{tpu_custom_call.1} parent=1 // pred_region
      %310 = dma.done [#allocation3], 512
    $region29: #{tpu_custom_call.1} parent=1 // pred_fallthru
      _
    %311 = vsyncpa [#allocation3], 1

</llo_original>
